<compile_context>
chip_gen: v5e
topology: v5e:2x2
jax: 0.10.0
libtpu: 0.0.40
codegen_flags: <defaults>
</compile_context>

<pallas_src>
import functools

import jax
import jax.numpy as jnp
from jax.experimental import pallas as pl
from jax.experimental.pallas import tpu as pltpu


def _single_label_kernel(x_ref, w_ref, b_ref, lab_ref, logits_ref, part_ref,
                         *, batch, num_class, tile_b):
    """One batch tile: logits + partial CrossEntropy sum (integer labels)."""
    i = pl.program_id(0)
    tb, c_pad = logits_ref.shape

    # Dropout is identity in eval mode.
    logits = jnp.dot(x_ref[...], w_ref[...],
                     preferred_element_type=jnp.float32) + b_ref[...]
    logits_ref[...] = logits.astype(logits_ref.dtype)

    # Class-validity mask over the padded lane dim (static C -> constant vreg).
    col_ids = jax.lax.broadcasted_iota(jnp.int32, (tb, c_pad), 1)
    col_valid = col_ids < num_class

    # Correct-class logit without a gather: iota == label, select, row-sum.
    labels = lab_ref[...]                                      # (tb, 1) int32
    picked = jnp.sum(jnp.where(col_ids == labels, logits, 0.0),
                     axis=-1, keepdims=True)                   # (tb, 1)

    z = jnp.where(col_valid, logits, -jnp.inf)
    m = jnp.max(z, axis=-1, keepdims=True)
    lse = m + jnp.log(jnp.sum(jnp.exp(z - m), axis=-1, keepdims=True))
    ce_rows = lse - picked                                     # (tb, 1)

    if batch % tile_b != 0:        # static: only the ragged last tile needs it
        row_ids = i * tile_b + jax.lax.broadcasted_iota(jnp.int32, (tb, 1), 0)
        ce_rows = jnp.where(row_ids < batch, ce_rows, 0.0)

    part_ref[...] = jnp.broadcast_to(jnp.sum(ce_rows, keepdims=True),
                                     part_ref.shape)


def _multi_label_kernel(x_ref, w_ref, b_ref, y_ref, logits_ref, part_ref,
                        *, batch, num_class, tile_b):
    """One batch tile: logits + partial BCE-with-logits sum (multi-hot bf16)."""
    i = pl.program_id(0)
    tb, c_pad = logits_ref.shape

    logits = jnp.dot(x_ref[...], w_ref[...],
                     preferred_element_type=jnp.float32) + b_ref[...]
    logits_ref[...] = logits.astype(logits_ref.dtype)

    y = y_ref[...].astype(jnp.float32)                         # (tb, c_pad)
    z = logits
    bce = jnp.maximum(z, 0.0) - z * y + jnp.log1p(jnp.exp(-jnp.abs(z)))

    col_ids = jax.lax.broadcasted_iota(jnp.int32, (tb, c_pad), 1)
    valid = col_ids < num_class
    if batch % tile_b != 0:        # static: only the ragged last tile needs it
        row_ids = i * tile_b + jax.lax.broadcasted_iota(jnp.int32, (tb, c_pad), 0)
        valid = jnp.logical_and(valid, row_ids < batch)
    bce = jnp.where(valid, bce, 0.0)

    part_ref[...] = jnp.broadcast_to(jnp.sum(bce, keepdims=True),
                                     part_ref.shape)


def _round_up(x, m):
    return (x + m - 1) // m * m


def _pick_batch_tile(batch, d, c_pad, x_item, tgt_row_bytes, out_item,
                     budget_bytes=12 << 20):
    """Largest row tile (multiple of 16, <=1024) whose streams fit the VMEM budget.

    Budget accounts for double-buffered x / target / logits streams plus the
    VMEM-resident (but double-allocated) weight & bias and the partial block.
    12 MiB keeps us under v5e's 16 MiB scoped default with headroom.
    """
    per_row = 2 * (d * x_item + tgt_row_bytes + c_pad * out_item)
    resident = 2 * (d * c_pad * x_item + c_pad * 4) + 2 * 8 * 128 * 4
    tb = _round_up(min(max(batch, 1), 1024), 16)
    while tb > 16 and resident + tb * per_row > budget_bytes:
        tb = max(16, _round_up(tb // 2, 16))
    return tb


@functools.partial(jax.jit, static_argnames=("ctype",))
def classifier_forward(pooled_output, weight, bias, labels, ctype="single-label"):
    """Pallas classifier head.

    pooled_output : [B, D]  encoder pooler output (f32 or bf16)
    weight        : [C, D]  nn.Linear weight (PyTorch layout)
    bias          : [C]
    labels        : single-label -> [B]    integer class indices
                    multi-label  -> [B, C] {0,1} multi-hot targets
    Returns (logits [B, C] in pooled_output.dtype, mean loss scalar f32).
    """
    assert ctype in ("single-label", "multi-label")
    single = ctype == "single-label"

    B, D = pooled_output.shape
    C = weight.shape[0]
    c_pad = _round_up(max(C, 1), 128)            # lane-dense class dim
    out_dtype = pooled_output.dtype
    x_item = jnp.dtype(pooled_output.dtype).itemsize
    out_item = jnp.dtype(out_dtype).itemsize

    # Weight^T padded on the class (lane) dim; bias padded, kept f32.
    w_t = jnp.pad(weight.T.astype(pooled_output.dtype), ((0, 0), (0, c_pad - C)))
    b_row = jnp.pad(bias.astype(jnp.float32).reshape(1, C), ((0, 0), (0, c_pad - C)))

    if single:
        tgt = labels.astype(jnp.int32).reshape(B, 1)          # 4 B/row stream
        tgt_row_bytes = 4
    else:
        tgt = jnp.pad(labels.astype(jnp.bfloat16), ((0, 0), (0, c_pad - C)))
        tgt_row_bytes = c_pad * 2

    tb = _pick_batch_tile(B, D, c_pad, x_item, tgt_row_bytes, out_item)
    nb = pl.cdiv(B, tb)

    kernel = functools.partial(
        _single_label_kernel if single else _multi_label_kernel,
        batch=B, num_class=C, tile_b=tb)

    tgt_spec = (pl.BlockSpec((tb, 1), lambda i: (i, 0)) if single
                else pl.BlockSpec((tb, c_pad), lambda i: (i, 0)))

    cost = pl.CostEstimate(
        flops=2 * B * D * c_pad,
        transcendentals=2 * B * c_pad,
        bytes_accessed=(B * D * x_item + D * c_pad * x_item + c_pad * 4
                        + B * tgt_row_bytes + B * c_pad * out_item
                        + nb * 8 * 128 * 4),
    )

    logits_pad, partials = pl.pallas_call(
        kernel,
        out_shape=(
            jax.ShapeDtypeStruct((B, c_pad), out_dtype),        # logits (lane-dense)
            jax.ShapeDtypeStruct((nb * 8, 128), jnp.float32),   # per-tile loss partials
        ),
        grid=(nb,),
        in_specs=[
            pl.BlockSpec((tb, D), lambda i: (i, 0)),            # pooled tile
            pl.BlockSpec((D, c_pad), lambda i: (0, 0)),         # weight (VMEM resident)
            pl.BlockSpec((1, c_pad), lambda i: (0, 0)),         # bias   (VMEM resident)
            tgt_spec,                                           # labels / targets tile
        ],
        out_specs=(
            pl.BlockSpec((tb, c_pad), lambda i: (i, 0)),        # logits tile
            pl.BlockSpec((8, 128), lambda i: (i, 0)),           # partial loss block
        ),
        # Tiles are fully independent (per-tile partial losses), so the batch
        # axis can be "parallel" -> uses both TensorCores on v7x.
        compiler_params=pltpu.CompilerParams(
            dimension_semantics=("parallel",),
            vmem_limit_bytes=32 << 20,
        ),
        cost_estimate=cost,
    )(pooled_output, w_t, b_row, tgt)

    # Every element of each (8,128) partial block holds the same tile sum.
    loss_sum = jnp.sum(partials[::8, 0])
    loss = loss_sum / (jnp.float32(B) if single else jnp.float32(B * C))
    logits = logits_pad[:, :C]
    return logits, loss


def init_params(key, sent_emb_dim, num_class):
    """Deterministic parameter init matching nn.Linear + xavier_uniform_ on weight."""
    kw, kb = jax.random.split(key)
    # xavier_uniform_: U(-a, a), a = sqrt(6 / (fan_in + fan_out))
    a = (6.0 / (sent_emb_dim + num_class)) ** 0.5
    weight = jax.random.uniform(kw, (num_class, sent_emb_dim),
                                minval=-a, maxval=a, dtype=jnp.float32)
    # nn.Linear bias default: U(-1/sqrt(fan_in), 1/sqrt(fan_in))
    bound = 1.0 / (sent_emb_dim ** 0.5)
    bias = jax.random.uniform(kb, (num_class,),
                              minval=-bound, maxval=bound, dtype=jnp.float32)
    return weight, bias


if __name__ == "__main__":
    key = jax.random.PRNGKey(0)
    k_pool, k_param, k_lab = jax.random.split(key, 3)

    B = 8              # batch
    D = 128            # sent_emb_dim
    C = 4              # num_class

    # Stand-in for encoder(...).pooler_output (encoder itself is external).
    pooled = jax.random.normal(k_pool, (B, D), dtype=jnp.float32)
    weight, bias = init_params(k_param, D, C)          # weight: [C, D] like PyTorch

    labels = jax.random.randint(k_lab, (B,), 0, C)     # integer class ids (single-label)
    multi_hot = jax.nn.one_hot(labels, C, dtype=jnp.float32)  # doubles as multi-hot targets

    logits_s, ce_loss = classifier_forward(pooled, weight, bias, labels,
                                           ctype="single-label")
    logits_m, bce_loss = classifier_forward(pooled, weight, bias, multi_hot,
                                            ctype="multi-label")
    jax.block_until_ready((logits_s, ce_loss, logits_m, bce_loss))

    # Lightweight correctness check against a plain JAX reference.
    ref_logits = pooled @ weight.T + bias
    ref_ce = jnp.mean(jax.scipy.special.logsumexp(ref_logits, axis=-1)
                      - ref_logits[jnp.arange(B), labels])
    ref_bce = jnp.mean(jnp.maximum(ref_logits, 0.0) - ref_logits * multi_hot
                       + jnp.log1p(jnp.exp(-jnp.abs(ref_logits))))

    assert jnp.allclose(logits_s, ref_logits, atol=1e-4, rtol=1e-4)
    assert jnp.allclose(logits_m, ref_logits, atol=1e-4, rtol=1e-4)
    assert jnp.allclose(ce_loss, ref_ce, atol=1e-5, rtol=1e-5)
    assert jnp.allclose(bce_loss, ref_bce, atol=1e-5, rtol=1e-5)

    print("KERNEL_OK")
</pallas_src>

<mosaic_0001>
module attributes {stable_mosaic.version = 11 : i64} {
  func.func @_single_label_kernel(%arg0: i32, %arg1: memref<16x128xf32, #tpu.memory_space<vmem>>, %arg2: memref<128x128xf32, #tpu.memory_space<vmem>>, %arg3: memref<1x128xf32, #tpu.memory_space<vmem>>, %arg4: memref<16x1xi32, #tpu.memory_space<vmem>>, %arg5: memref<16x128xf32, #tpu.memory_space<vmem>>, %arg6: memref<8x128xf32, #tpu.memory_space<vmem>>) attributes {dimension_semantics = [#tpu.dimension_semantics<parallel>], iteration_bounds = array<i64: 1>, scalar_prefetch = 0 : i64, scratch_operands = 0 : i64, tpu.core_type = #tpu.core_type<tc>, window_params = [{transform_indices = @transform_0, window_bounds = array<i64: 16, 128>}, {pipeline_mode = #tpu.pipeline_mode<synchronous>, transform_indices = @transform_1, window_bounds = array<i64: 128, 128>}, {pipeline_mode = #tpu.pipeline_mode<synchronous>, transform_indices = @transform_2, window_bounds = array<i64: 1, 128>}, {transform_indices = @transform_3, window_bounds = array<i64: 16, 1>}, {transform_indices = @transform_4, window_bounds = array<i64: 16, 128>}, {transform_indices = @transform_5, window_bounds = array<i64: 8, 128>}]} {
    %c0 = arith.constant 0 : index
    %c0_0 = arith.constant 0 : index
    %0 = vector.load %arg1[%c0, %c0_0] : memref<16x128xf32, #tpu.memory_space<vmem>>, vector<16x128xf32>
    %c0_1 = arith.constant 0 : index
    %c0_2 = arith.constant 0 : index
    %1 = vector.load %arg2[%c0_1, %c0_2] : memref<128x128xf32, #tpu.memory_space<vmem>>, vector<128x128xf32>
    %cst = arith.constant dense<0.000000e+00> : vector<16x128xf32>
    %2 = tpu.matmul %0, %1, %cst {dimension_numbers = #tpu.dot_dimension_numbers<[1], [0], [0], [1], [0, 0, 1, 1], [], []>} : vector<16x128xf32>, vector<128x128xf32>, vector<16x128xf32> -> vector<16x128xf32>
    %c0_3 = arith.constant 0 : index
    %c0_4 = arith.constant 0 : index
    %3 = vector.load %arg3[%c0_3, %c0_4] : memref<1x128xf32, #tpu.memory_space<vmem>>, vector<1x128xf32>
    %4 = vector.broadcast %3 : vector<1x128xf32> to vector<16x128xf32>
    %5 = arith.addf %2, %4 : vector<16x128xf32>
    %c0_5 = arith.constant 0 : index
    %c0_6 = arith.constant 0 : index
    %6 = vector.load %arg5[%c0_5, %c0_6] : memref<16x128xf32, #tpu.memory_space<vmem>>, vector<16x128xf32>
    tpu.vector_store %arg5[%c0_5, %c0_6], %5 {strides = array<i32>} : memref<16x128xf32, #tpu.memory_space<vmem>>, vector<16x128xf32>,
    %7 = tpu.iota {dimensions = array<i32: 1>} : vector<16x128xi32>
    %c4_i32 = arith.constant 4 : i32
    %8 = vector.broadcast %c4_i32 : i32 to vector<16x128xi32>
    %9 = arith.cmpi slt, %7, %8 : vector<16x128xi32>
    %c0_7 = arith.constant 0 : index
    %c0_8 = arith.constant 0 : index
    %10 = vector.load %arg4[%c0_7, %c0_8] : memref<16x1xi32, #tpu.memory_space<vmem>>, vector<16x1xi32>
    %11 = vector.broadcast %10 : vector<16x1xi32> to vector<16x128xi32>
    %12 = arith.cmpi eq, %7, %11 : vector<16x128xi32>
    %cst_9 = arith.constant 0.000000e+00 : f32
    %13 = vector.broadcast %cst_9 : f32 to vector<16x128xf32>
    %14 = arith.select %12, %5, %13 : vector<16x128xi1>, vector<16x128xf32>
    %cst_10 = arith.constant dense<0.000000e+00> : vector<16xf32>
    %15 = vector.multi_reduction <add>, %14, %cst_10 [1] : vector<16x128xf32> to vector<16xf32>
    %16 = vector.shape_cast %15 : vector<16xf32> to vector<16x1xf32>
    %cst_11 = arith.constant 0xFF800000 : f32
    %17 = vector.broadcast %cst_11 : f32 to vector<16x128xf32>
    %18 = arith.select %9, %5, %17 : vector<16x128xi1>, vector<16x128xf32>
    %cst_12 = arith.constant dense<0xFF800000> : vector<16xf32>
    %19 = vector.multi_reduction <maximumf>, %18, %cst_12 [1] : vector<16x128xf32> to vector<16xf32>
    %20 = vector.shape_cast %19 : vector<16xf32> to vector<16x1xf32>
    %21 = vector.broadcast %20 : vector<16x1xf32> to vector<16x128xf32>
    %22 = arith.subf %18, %21 : vector<16x128xf32>
    %23 = math.exp %22 : vector<16x128xf32>
    %cst_13 = arith.constant dense<0.000000e+00> : vector<16xf32>
    %24 = vector.multi_reduction <add>, %23, %cst_13 [1] : vector<16x128xf32> to vector<16xf32>
    %25 = vector.shape_cast %24 : vector<16xf32> to vector<16x1xf32>
    %26 = math.log %25 : vector<16x1xf32>
    %27 = arith.addf %20, %26 : vector<16x1xf32>
    %28 = arith.subf %27, %16 : vector<16x1xf32>
    %c16_i32 = arith.constant 16 : i32
    %29 = arith.muli %arg0, %c16_i32 : i32
    %30 = tpu.iota {dimensions = array<i32: 0>} : vector<16x1xi32>
    %31 = vector.broadcast %29 : i32 to vector<16x1xi32>
    %32 = arith.addi %31, %30 : vector<16x1xi32>
    %c8_i32 = arith.constant 8 : i32
    %33 = vector.broadcast %c8_i32 : i32 to vector<16x1xi32>
    %34 = arith.cmpi slt, %32, %33 : vector<16x1xi32>
    %cst_14 = arith.constant 0.000000e+00 : f32
    %35 = vector.broadcast %cst_14 : f32 to vector<16x1xf32>
    %36 = arith.select %34, %28, %35 : vector<16x1xi1>, vector<16x1xf32>
    %37 = vector.shape_cast %36 : vector<16x1xf32> to vector<1x16x1xf32>
    %cst_15 = arith.constant dense<0.000000e+00> : vector<1xf32>
    %38 = vector.multi_reduction <add>, %37, %cst_15 [1, 2] : vector<1x16x1xf32> to vector<1xf32>
    %39 = vector.shape_cast %38 : vector<1xf32> to vector<1x1x1xf32>
    %40 = vector.extract %39[0, 0, 0] : f32 from vector<1x1x1xf32>
    %41 = vector.broadcast %40 : f32 to vector<1x1xf32>
    %42 = vector.shape_cast %41 : vector<1x1xf32> to vector<1x1xf32>
    %43 = vector.broadcast %42 : vector<1x1xf32> to vector<8x128xf32>
    %c0_16 = arith.constant 0 : index
    %c0_17 = arith.constant 0 : index
    %44 = vector.load %arg6[%c0_16, %c0_17] : memref<8x128xf32, #tpu.memory_space<vmem>>, vector<8x128xf32>
    tpu.vector_store %arg6[%c0_16, %c0_17], %43 {strides = array<i32>} : memref<8x128xf32, #tpu.memory_space<vmem>>, vector<8x128xf32>,
    return
  }
  func.func @transform_0(%arg0: i32) -> (i32, i32) {
    %c0_i32 = arith.constant 0 : i32
    %c0_i32_0 = arith.constant 0 : i32
    return %arg0, %c0_i32 : i32, i32
  }
  func.func @transform_1(%arg0: i32) -> (i32, i32) {
    %c0_i32 = arith.constant 0 : i32
    %c0_i32_0 = arith.constant 0 : i32
    %c0_i32_1 = arith.constant 0 : i32
    return %c0_i32, %c0_i32_0 : i32, i32
  }
  func.func @transform_2(%arg0: i32) -> (i32, i32) {
    %c0_i32 = arith.constant 0 : i32
    %c0_i32_0 = arith.constant 0 : i32
    %c0_i32_1 = arith.constant 0 : i32
    return %c0_i32, %c0_i32_0 : i32, i32
  }
  func.func @transform_3(%arg0: i32) -> (i32, i32) {
    %c0_i32 = arith.constant 0 : i32
    %c0_i32_0 = arith.constant 0 : i32
    return %arg0, %c0_i32 : i32, i32
  }
  func.func @transform_4(%arg0: i32) -> (i32, i32) {
    %c0_i32 = arith.constant 0 : i32
    %c0_i32_0 = arith.constant 0 : i32
    return %arg0, %c0_i32 : i32, i32
  }
  func.func @transform_5(%arg0: i32) -> (i32, i32) {
    %c0_i32 = arith.constant 0 : i32
    %c0_i32_0 = arith.constant 0 : i32
    return %arg0, %c0_i32 : i32, i32
  }
}

</mosaic_0001>

<llo_original>
// kernel: classifier_forward.1
$region0: #{classifier_forward.1}
  #allocation0 [shape = 'u32[]', space=smem, size = 0x4, offset = 0x4, fixed_abs, tag = 'smem constant byte address 0x4 - core index']
  #allocation1 [shape = 'u32[72,128]{1,0:T(1,128)}', space=vmem, size = 0x9000, scoped, tag = 'internal scratch']
  %s0 = inlined_call_operand.vmem [shape: f32[8,128], index: 0, kind: input, shape index: {}]
  %s1 = inlined_call_operand.vmem [shape: f32[128,128], index: 1, kind: input, shape index: {}]
  %s2 = inlined_call_operand.vmem [shape: f32[1,128], index: 2, kind: input, shape index: {}]
  %s3 = inlined_call_operand.vmem [shape: s32[8,1], index: 3, kind: input, shape index: {}]
  %s4 = inlined_call_operand.vmem [shape: f32[8,128], index: 4, kind: output, shape index: {0}]
  %s5 = inlined_call_operand.vmem [shape: f32[8,128], index: 5, kind: output, shape index: {1}]
  %6 = xla_tuple %s4, %s5
  %s7 = sld [smem:[#allocation0]]
  $region68: #{classifier_forward.1} parent=0
    _
  %s9 = ssub.s32 1, %s7
  %s10 = scalar_select 0, %s9, %s7
  $region1: #{classifier_forward.1} parent=0
    #allocation2 [shape = 'u8[8192]{0}', space=vmem, size = 0x2000, scoped, tag = 'output window, operand 0, single buffered']
    // Predicated region
    $region2: #{classifier_forward.1} parent=1 // pred_check
      _
    $region3: #{classifier_forward.1} parent=1 // pred_check_branch
      %12 = sbr.rel (0) target = $region5
    $region4: #{classifier_forward.1} parent=1 // pred_region
      _
    $region5: #{classifier_forward.1} parent=1 // pred_fallthru
      _
    // Predicated region
    $region6: #{classifier_forward.1} parent=1 // pred_check
      _
    $region7: #{classifier_forward.1} parent=1 // pred_check_branch
      %14 = sbr.rel (0) target = $region9
    $region8: #{classifier_forward.1} parent=1 // pred_region
      _
    $region9: #{classifier_forward.1} parent=1 // pred_fallthru
      _
    // Predicated region
    $region10: #{classifier_forward.1} parent=1 // pred_check
      _
    $region11: #{classifier_forward.1} parent=1 // pred_check_branch
      %16 = sbr.rel (0) target = $region13
    $region12: #{classifier_forward.1} parent=1 // pred_region
      _
    $region13: #{classifier_forward.1} parent=1 // pred_fallthru
      _
    // Predicated region
    $region14: #{classifier_forward.1} parent=1 // pred_check
      _
    $region15: #{classifier_forward.1} parent=1 // pred_check_branch
      %18 = sbr.rel (0) target = $region17
    $region16: #{classifier_forward.1} parent=1 // pred_region
      _
    $region17: #{classifier_forward.1} parent=1 // pred_fallthru
      _
    %v19 = vld [vmem:[%s0] sm:$0xff]
    %v20 = vld [vmem:[%s0 + $0x8] sm:$0xff]
    %v21 = vld [vmem:[%s1] sm:$0xff]
    %v22 = vld [vmem:[%s1 + $0x8] sm:$0xff]
    %v23 = vld [vmem:[%s1 + $0x10] sm:$0xff]
    %v24 = vld [vmem:[%s1 + $0x18] sm:$0xff]
    %v25 = vld [vmem:[%s1 + $0x20] sm:$0xff]
    %v26 = vld [vmem:[%s1 + $0x28] sm:$0xff]
    %v27 = vld [vmem:[%s1 + $0x30] sm:$0xff]
    %v28 = vld [vmem:[%s1 + $0x38] sm:$0xff]
    %v29 = vld [vmem:[%s1 + $0x40] sm:$0xff]
    %v30 = vld [vmem:[%s1 + $0x48] sm:$0xff]
    %v31 = vld [vmem:[%s1 + $0x50] sm:$0xff]
    %v32 = vld [vmem:[%s1 + $0x58] sm:$0xff]
    %v33 = vld [vmem:[%s1 + $0x60] sm:$0xff]
    %v34 = vld [vmem:[%s1 + $0x68] sm:$0xff]
    %v35 = vld [vmem:[%s1 + $0x70] sm:$0xff]
    %v36 = vld [vmem:[%s1 + $0x78] sm:$0xff]
    %v37 = vld [vmem:[%s2] sm:$0x1]
    %v39 = vperm.slane %v37, 0
    %41 = vmatpush.msra.mxu0 %v36
    %42 = vmatpush.msra.mxu0 %v35
    %43 = vmatpush.msra.mxu0 %v34
    %44 = vmatpush.msra.mxu0 %v33
    %45 = vmatpush.msra.mxu0 %v32
    %46 = vmatpush.msra.mxu0 %v31
    %47 = vmatpush.msra.mxu0 %v30
    %48 = vmatpush.msra.mxu0 %v29
    %49 = vmatpush.msra.mxu0 %v28
    %50 = vmatpush.msra.mxu0 %v27
    %51 = vmatpush.msra.mxu0 %v26
    %52 = vmatpush.msra.mxu0 %v25
    %53 = vmatpush.msra.mxu0 %v24
    %54 = vmatpush.msra.mxu0 %v23
    %55 = vmatpush.msra.mxu0 %v22
    %56 = vmatpush.msra.mxu0 %v21
    %57 = vmatmul.f32.gmra.mxu0 %v19
    %v58 = vpop.f32.mrf.mxu0
    %v59 = vadd.f32 %v39, %v58
    %60 = vmatmul.f32.gmra.mxu0 %v20
    %v61 = vpop.f32.mrf.mxu0
    %v62 = vadd.f32 %v39, %v61
    %63 = vdwg.mxu0
    %64 = vst [vmem:[#allocation2] sm:$0xff] %v59
    %65 = vst [vmem:[#allocation2 + $0x8] sm:$0xff] %v62
    %v66 = vlaneseq
    %v67 = vand.u32 %v66, 127
    %vm68 = vcmp.lt.s32.totalorder %v67, 4
    %v69 = vld [vmem:[%s3] sm:$0xff]
    %v70 = vld [vmem:[%s3 + $0x8] sm:$0xff]
    %71 = vset.pattern.permute.xlu0 0
    %72 = vperm.xlu0 %71, %v69
    %v73 = vpop.permute.xlu0 %72
    %74 = vset.pattern.permute.xlu0 0
    %75 = vperm.xlu0 %74, %v70
    %v76 = vpop.permute.xlu0 %75
    %vm77 = vcmp.eq.s32.totalorder %v67, %v73
    %vm78 = vcmp.eq.s32.totalorder %v67, %v76
    %v79 = vsel %vm77, %v59, 0.0
    %v80 = vsel %vm78, %v62, 0.0
    %81 = vadd.xlane.f32.xlu0 %v79
    %v82 = vpop.xlane.xlu0 %81
    %83 = vadd.xlane.f32.xlu0 %v80
    %v84 = vpop.xlane.xlu0 %83
    %v85 = vsel %vm68, %v59, -inf
    %v86 = vsel %vm68, %v62, -inf
    %87 = vmax.xlane.f32.xlu0 %v85
    %v88 = vpop.xlane.xlu0 %87
    %89 = vmax.xlane.f32.xlu0 %v86
    %v90 = vpop.xlane.xlu0 %89
    %v91 = vsub.f32 %v85, %v88
    %v92 = vsub.f32 %v86, %v90
    %v93 = vmul.f32 %v91, 1.442695
    %v94 = vpow.pop %v93
    %v95 = vmul.f32 %v92, 1.442695
    %v96 = vpow.pop %v95
    %97 = vadd.xlane.f32.xlu0 %v94
    %v98 = vpop.xlane.xlu0 %97
    %99 = vadd.xlane.f32.xlu0 %v96
    %v100 = vpop.xlane.xlu0 %99
    %v101 = vlog2.pop %v98
    %v102 = vmul.f32 %v101, 0.6931472
    %v103 = vlog2.pop %v100
    %v104 = vmul.f32 %v103, 0.6931472
    %v105 = vadd.f32 %v88, %v102
    %v106 = vadd.f32 %v90, %v104
    %v107 = vsub.f32 %v105, %v82
    %v108 = vsub.f32 %v106, %v84
    %s109 = smul.u32 0, 16
    %v110 = vlaneseq
    %v111 = vshrl.u32 %v110, 7
    %v112 = vadd.s32 %v111, 8
    %v113 = vstv %s109
    %v114 = vadd.s32 %v113, %v111
    %v115 = vadd.s32 %v113, %v112
    %vm116 = vcmp.lt.s32.totalorder %v114, 8
    %vm117 = vcmp.lt.s32.totalorder %v115, 8
    %v118 = vsel %vm116, %v107, 0.0
    %v119 = vsel %vm117, %v108, 0.0
    %vm120 = vcmask 7168
    %v121 = vsel %vm120, %v118, 0.0
    %v122 = vsel %vm120, %v119, 0.0
    %v123 = vadd.f32 %v121, %v122
    %124 = vadd.xlane.f32.xlu0 %v123
    %v125 = vpop.xlane.xlu0 %124
    %v126 = vrot.slane %v125, 4
    %v127 = vadd.f32 %v125, %v126
    %v128 = vrot.slane %v127, 2
    %v129 = vadd.f32 %v127, %v128
    %v130 = vrot.slane %v129, 1
    %v131 = vadd.f32 %v129, %v130
    %s132 = vtos %v131
    %v133 = vstv %s132
    %134 = vst [vmem:[%s5] sm:$0xff] %v133
    // Predicated region
    $region18: #{classifier_forward.1} parent=1 // pred_check
      _
    $region19: #{classifier_forward.1} parent=1 // pred_check_branch
      %136 = sbr.rel (0) target = $region21
    $region20: #{classifier_forward.1} parent=1 // pred_region
      // Predicated region
      $region22: #{classifier_forward.1} parent=20 // pred_check
        _
      $region23: #{classifier_forward.1} parent=20 // pred_check_branch
        %138 = sbr.rel (0) target = $region25
      $region24: #{classifier_forward.1} parent=20 // pred_region
        // Predicated region
        $region26: #{classifier_forward.1} parent=24 // pred_check
          _
        $region27: #{classifier_forward.1} parent=24 // pred_check_branch
          %140 = sbr.rel (0) target = $region29
        $region28: #{classifier_forward.1} parent=24 // pred_region
          // Predicated region
          $region41: #{classifier_forward.1} parent=28 // pred_check
            _
          $region42: #{classifier_forward.1} parent=28 // pred_check_branch
            %156 = sbr.rel (0) target = $region44
          $region43: #{classifier_forward.1} parent=28 // pred_region
            loop: start=0, step=1, limit=1
            $region45: #{classifier_forward.1} parent=43 // loop_pre_header
              _
            $region46: #{classifier_forward.1} parent=43 // loop_header
              %s158 = sphi 0, %s162
              %p159 = scmp.ge.s32.totalorder %s158, 1
              %s163 = sphi [#allocation2], [#allocation2]
              %s164 = sphi %s4, %s4
            $region47: #{classifier_forward.1} parent=43 // loop_header_branch
              %161 = sbr.rel (%p159) target = $region51
            $region48: #{classifier_forward.1} parent=43 // loop_body
              %v165 = vld [vmem:[%s163] sm:$0xff]
              %166 = vst [vmem:[%s164] sm:$0xff] %v165
            $region49: #{classifier_forward.1} parent=43 // loop_footer
              %s162 = sadd.s32 1, %s158
            $region50: #{classifier_forward.1} parent=43 // loop_footer_branch
              %157 = sbr.rel target = $region46
            $region51: #{classifier_forward.1} parent=43 // loop_exit
              _
          $region44: #{classifier_forward.1} parent=28 // pred_fallthru
            _
          // Predicated region
          $region52: #{classifier_forward.1} parent=28 // pred_check
            _
          $region53: #{classifier_forward.1} parent=28 // pred_check_branch
            %168 = sbr.rel target = $region55
          $region54: #{classifier_forward.1} parent=28 // pred_region
            _
          $region55: #{classifier_forward.1} parent=28 // pred_fallthru
            _
        $region29: #{classifier_forward.1} parent=24 // pred_fallthru
          _
        // Predicated region
        $region30: #{classifier_forward.1} parent=24 // pred_check
          _
        $region31: #{classifier_forward.1} parent=24 // pred_check_branch
          %142 = sbr.rel target = $region33
        $region32: #{classifier_forward.1} parent=24 // pred_region
          %s144 = ssub.s32 256, 1
          loop: start=0, step=1, limit=1
          $region34: #{classifier_forward.1} parent=32 // loop_pre_header
            _
          $region35: #{classifier_forward.1} parent=32 // loop_header
            %s146 = sphi 0, %s150
            %p147 = scmp.ge.s32.totalorder %s146, 1
            %s151 = sphi [#allocation2], [#allocation2]
            %s152 = sphi %s4, %s4
          $region36: #{classifier_forward.1} parent=32 // loop_header_branch
            %149 = sbr.rel (%p147) target = $region40
          $region37: #{classifier_forward.1} parent=32 // loop_body
            %v153 = vld [vmem:[%s151] sm:%s144]
            %154 = vst [vmem:[%s152] sm:%s144] %v153
          $region38: #{classifier_forward.1} parent=32 // loop_footer
            %s150 = sadd.s32 1, %s146
          $region39: #{classifier_forward.1} parent=32 // loop_footer_branch
            %145 = sbr.rel target = $region35
          $region40: #{classifier_forward.1} parent=32 // loop_exit
            _
        $region33: #{classifier_forward.1} parent=24 // pred_fallthru
          _
      $region25: #{classifier_forward.1} parent=20 // pred_fallthru
        _
      %169 = vnop
    $region21: #{classifier_forward.1} parent=1 // pred_fallthru
      _
    // Predicated region
    $region56: #{classifier_forward.1} parent=1 // pred_check
      _
    $region57: #{classifier_forward.1} parent=1 // pred_check_branch
      %171 = sbr.rel (0) target = $region59
    $region58: #{classifier_forward.1} parent=1 // pred_region
      _
    $region59: #{classifier_forward.1} parent=1 // pred_fallthru
      _
    // Predicated region
    $region60: #{classifier_forward.1} parent=1 // pred_check
      _
    $region61: #{classifier_forward.1} parent=1 // pred_check_branch
      %173 = sbr.rel (0) target = $region63
    $region62: #{classifier_forward.1} parent=1 // pred_region
      _
    $region63: #{classifier_forward.1} parent=1 // pred_fallthru
      _
    // Predicated region
    $region64: #{classifier_forward.1} parent=1 // pred_check
      _
    $region65: #{classifier_forward.1} parent=1 // pred_check_branch
      %175 = sbr.rel (0) target = $region67
    $region66: #{classifier_forward.1} parent=1 // pred_region
      _
    $region67: #{classifier_forward.1} parent=1 // pred_fallthru
      _

</llo_original>
